<compile_context>
chip_gen: v7x
topology: tpu7x:2x2x1
jax: 0.10.0
libtpu: 0.0.40
codegen_flags: <defaults>
</compile_context>

<pallas_src>
import functools

import jax
import jax.numpy as jnp
from jax.experimental import pallas as pl
from jax.experimental.pallas import tpu as pltpu

_LANES = 128      # lane width of the partial-sums slab
_SUBLANES = 8     # sublane height of the partial-sums slab (full vreg)
_NCORES = 2       # leading "parallel" axis: uses both v7x TensorCores


def _ece_partials_kernel(logits_ref, labels_ref, out_ref, acc_ref, *,
                         n_bins: int, n_valid: int, tile_n: int,
                         tiles_per_core: int):
    core = pl.program_id(0)
    j = pl.program_id(1)

    # Zero this core's resident accumulator at the start of its reduction.
    @pl.when(j == 0)
    def _():
        acc_ref[...] = jnp.zeros_like(acc_ref)

    logits = logits_ref[...].astype(jnp.float32)      # (tile_n, C) f32
    labels = labels_ref[...]                          # (tile_n, 1) int32
    tn, c = logits.shape

    # conf = max softmax prob = exp(0) / sum(exp(x - row_max)); true f32 divide
    # so the value (and therefore the bin assignment) matches the reference
    # softmax bit-for-bit.  No (N, C) softmax is materialized.
    row_max = jnp.max(logits, axis=1, keepdims=True)                  # (tn, 1)
    denom = jnp.sum(jnp.exp(logits - row_max), axis=1, keepdims=True)  # (tn, 1)
    conf = jnp.float32(1.0) / denom                                   # (tn, 1)

    # Gather the label logit before the exp (no float one-hot / (N,C) divide).
    col_idx = jax.lax.broadcasted_iota(jnp.int32, (tn, c), 1)
    logit_at_label = jnp.sum(
        jnp.where(col_idx == labels, logits, jnp.float32(0.0)),
        axis=1, keepdims=True)                                        # (tn, 1)
    acc_p = jnp.exp(logit_at_label - row_max) / denom                 # (tn, 1)

    # Mask rows that are padding past the true batch size.
    row0 = (core * tiles_per_core + j) * tile_n
    row_idx = row0 + jax.lax.broadcasted_iota(jnp.int32, (tn, 1), 0)
    valid = (row_idx < n_valid).astype(jnp.float32)                   # (tn, 1)

    # Vectorized histogram: lane b <-> bin (b/n_bins, (b+1)/n_bins].
    # Lanes >= n_bins have lower >= 1, so they never match (conf <= 1).
    lane = jax.lax.broadcasted_iota(
        jnp.int32, (1, _LANES), 1).astype(jnp.float32)
    lower = lane / jnp.float32(n_bins)
    upper = (lane + jnp.float32(1.0)) / jnp.float32(n_bins)
    in_bin_f = jnp.logical_and(conf > lower, conf <= upper).astype(
        jnp.float32)                                             # (tn, 128)

    # 8-lane payload: [valid, valid*conf, valid*acc, 0, ..., 0]   (tn, 8)
    lane8 = jax.lax.broadcasted_iota(jnp.int32, (tn, _SUBLANES), 1)
    payload = jnp.where(
        lane8 == 0, valid,
        jnp.where(lane8 == 1, valid * conf,
                  jnp.where(lane8 == 2, valid * acc_p, jnp.float32(0.0))))

    # Per-bin [count, sum-conf, sum-label-prob] partials via one MXU matmul
    # (contract over rows): payload^T @ in_bin_f -> (8, 128).
    acc_ref[...] += jax.lax.dot_general(
        payload, in_bin_f,
        dimension_numbers=(((0,), (0,)), ((), ())),
        preferred_element_type=jnp.float32)

    # Single full-vreg store of this core's slab at the end of its reduction.
    @pl.when(j == tiles_per_core - 1)
    def _():
        out_ref[...] = acc_ref[...]


def _tpu_vmem_capacity_bytes():
    """Physical per-core VMEM; conservative v7x fallback if the query fails."""
    try:
        info = pltpu.get_tpu_info()
        for name in ("vmem_capacity_bytes", "vmem_bytes", "vmem_size_bytes"):
            v = getattr(info, name, None)
            if v:
                return int(v)
    except Exception:
        pass
    return 64 * 1024 * 1024


def _choose_tile_n(n, c, itemsize, budget_bytes):
    # Per-row VMEM cost (bytes):
    #   logits input, double-buffered ............ 2 * c * itemsize
    #   labels input, lane-padded to 128, x2 ..... 2 * 128 * 4
    #   f32 upcast of the logits tile ............ c * 4
    #   (tile_n, 128) bin matrix fed to the MXU .. 128 * 4
    #   column temps / spill headroom ............ ~2048
    per_row = 2 * c * itemsize + 2 * _LANES * 4 + c * 4 + _LANES * 4 + 2048
    t = budget_bytes // per_row
    t = max(32, (t // 32) * 32)          # multiple of 32: safe for all dtypes
    t = min(t, 32 * 1024)
    per_core = -(-n // _NCORES)          # ceil(n / ncores)
    per_core = max(32, -(-per_core // 32) * 32)
    return int(min(t, per_core))


def est_ece_loss(logits, labels, n_bins: int = 15, *, tile_n=None):
    """Pallas implementation of estECELoss.forward.

    logits: (N, C) float array (any float dtype; upcast to f32 in-kernel)
    labels: (N,)   int array with values in [0, C)
    returns: (1,)  float32 array (same convention as the torch module)
    """
    assert logits.ndim == 2
    assert 1 <= n_bins <= _LANES
    n, c = logits.shape

    vmem_cap = _tpu_vmem_capacity_bytes()
    budget = min(vmem_cap // 2, 48 * 1024 * 1024)       # v7x: 32 MiB, else 48
    vmem_limit = int(min(vmem_cap * 3 // 4, budget + 16 * 1024 * 1024))

    if tile_n is None:
        tile_n = _choose_tile_n(n, c, jnp.dtype(logits.dtype).itemsize, budget)
    assert tile_n % 32 == 0, "tile_n must be a multiple of 32"

    tiles_per_core = max(1, -(-n // (_NCORES * tile_n)))
    n_pad = _NCORES * tiles_per_core * tile_n

    labels2d = labels.reshape(n, 1).astype(jnp.int32)
    if n_pad != n:
        logits = jnp.pad(logits, ((0, n_pad - n), (0, 0)))
        labels2d = jnp.pad(labels2d, ((0, n_pad - n), (0, 0)))

    kernel = functools.partial(
        _ece_partials_kernel, n_bins=n_bins, n_valid=n, tile_n=tile_n,
        tiles_per_core=tiles_per_core)

    out = pl.pallas_call(
        kernel,
        out_shape=jax.ShapeDtypeStruct((_NCORES, _SUBLANES, _LANES),
                                       jnp.float32),
        grid=(_NCORES, tiles_per_core),
        in_specs=[
            pl.BlockSpec((tile_n, c),
                         lambda core, j: (core * tiles_per_core + j, 0)),
            pl.BlockSpec((tile_n, 1),
                         lambda core, j: (core * tiles_per_core + j, 0)),
        ],
        out_specs=pl.BlockSpec((None, _SUBLANES, _LANES),
                               lambda core, j: (core, 0, 0)),
        scratch_shapes=[pltpu.VMEM((_SUBLANES, _LANES), jnp.float32)],
        compiler_params=pltpu.CompilerParams(
            dimension_semantics=("parallel", "arbitrary"),
            vmem_limit_bytes=vmem_limit),
    )(logits, labels2d)

    # Tiny finalize in plain JAX: sum the per-core slabs, then the 15-bin
    # reduction (matches torch semantics, incl. the "skip empty bins" branch).
    partials = jnp.sum(out, axis=0)                    # (8, 128)
    cnt = partials[0, :n_bins]
    s_conf = partials[1, :n_bins]
    s_acc = partials[2, :n_bins]
    prop = cnt / jnp.float32(n)
    cnt_safe = jnp.maximum(cnt, jnp.float32(1.0))
    ece = jnp.sum(jnp.where(
        cnt > 0,
        jnp.abs(s_conf / cnt_safe - s_acc / cnt_safe) * prop,
        jnp.float32(0.0)))
    return ece.reshape(1)


def _est_ece_loss_ref(logits, labels, n_bins: int = 15):
    """Pure-JAX reference mirroring the torch code."""
    sm = jax.nn.softmax(logits.astype(jnp.float32), axis=1)
    conf = jnp.max(sm, axis=1)
    acc = jnp.take_along_axis(
        sm, labels.reshape(-1, 1).astype(jnp.int32), axis=1)[:, 0]
    n = logits.shape[0]
    ece = jnp.zeros((), jnp.float32)
    for b in range(n_bins):
        lower = jnp.float32(b) / n_bins
        upper = jnp.float32(b + 1) / n_bins
        in_bin = (conf > lower) & (conf <= upper)
        cnt = jnp.sum(in_bin.astype(jnp.float32))
        prop = cnt / n
        cnt_safe = jnp.maximum(cnt, 1.0)
        acc_in = jnp.sum(jnp.where(in_bin, acc, 0.0)) / cnt_safe
        conf_in = jnp.sum(jnp.where(in_bin, conf, 0.0)) / cnt_safe
        ece = ece + jnp.where(cnt > 0, jnp.abs(conf_in - acc_in) * prop, 0.0)
    return ece.reshape(1)


if __name__ == "__main__":
    key = jax.random.PRNGKey(0)
    k1, k2, k3, k4, k5, k6 = jax.random.split(key, 6)

    # Case 1: small, no padding (N = 64 samples, C = 16 classes), auto tile.
    N1, C1 = 64, 16
    logits1 = jax.random.normal(k1, (N1, C1), dtype=jnp.float32) * 2.0
    labels1 = jax.random.randint(k2, (N1,), 0, C1, dtype=jnp.int32)
    ece1 = est_ece_loss(logits1, labels1, n_bins=15)
    jax.block_until_ready(ece1)
    ref1 = _est_ece_loss_ref(logits1, labels1, n_bins=15)
    assert ece1.shape == (1,)
    assert jnp.allclose(ece1, ref1, atol=2e-5), (ece1, ref1)

    # Case 2: multi-step reduction per core with a ragged tail (exercises the
    # scratch accumulator across grid steps, the core split and the row mask).
    N2, C2 = 200, 10
    logits2 = jax.random.normal(k3, (N2, C2), dtype=jnp.float32) * 3.0
    labels2 = jax.random.randint(k4, (N2,), 0, C2, dtype=jnp.int32)
    ece2 = est_ece_loss(logits2, labels2, n_bins=15, tile_n=64)
    jax.block_until_ready(ece2)
    ref2 = _est_ece_loss_ref(logits2, labels2, n_bins=15)
    assert jnp.allclose(ece2, ref2, atol=2e-5), (ece2, ref2)

    # Case 3: bf16 logits on the wire, in-kernel f32 upcast, padded tail.
    N3, C3 = 96, 8
    logits3 = (jax.random.normal(k5, (N3, C3), dtype=jnp.float32)
               * 2.5).astype(jnp.bfloat16)
    labels3 = jax.random.randint(k6, (N3,), 0, C3, dtype=jnp.int32)
    ece3 = est_ece_loss(logits3, labels3, n_bins=15)
    jax.block_until_ready(ece3)
    ref3 = _est_ece_loss_ref(logits3, labels3, n_bins=15)
    assert jnp.allclose(ece3, ref3, atol=2e-5), (ece3, ref3)

    print("KERNEL_OK")
</pallas_src>

<mosaic_0001>
module attributes {stable_mosaic.version = 11 : i64} {
  func.func @_ece_partials_kernel(%arg0: i32, %arg1: i32, %arg2: memref<32x16xf32, #tpu.memory_space<vmem>>, %arg3: memref<32x1xi32, #tpu.memory_space<vmem>>, %arg4: memref<1x8x128xf32, #tpu.memory_space<vmem>>, %arg5: memref<8x128xf32, #tpu.memory_space<vmem>>) attributes {dimension_semantics = [#tpu.dimension_semantics<parallel>, #tpu.dimension_semantics<arbitrary>], iteration_bounds = array<i64: 2, 1>, scalar_prefetch = 0 : i64, scratch_operands = 1 : i64, tpu.core_type = #tpu.core_type<tc>, window_params = [{transform_indices = @transform_0, window_bounds = array<i64: 32, 16>}, {transform_indices = @transform_1, window_bounds = array<i64: 32, 1>}, {transform_indices = @transform_2, window_bounds = array<i64: 1, 8, 128>}]} {
    %c0_i32 = arith.constant 0 : i32
    %0 = arith.cmpi eq, %arg1, %c0_i32 : i32
    %1 = arith.extui %0 : i1 to i32
    %c0_i32_0 = arith.constant 0 : i32
    %2 = arith.cmpi ne, %1, %c0_i32_0 : i32
    scf.if %2 {
      %cst_21 = arith.constant 0.000000e+00 : f32
      %77 = vector.broadcast %cst_21 : f32 to vector<8x128xf32>
      %c0_22 = arith.constant 0 : index
      %c0_23 = arith.constant 0 : index
      %78 = vector.load %arg5[%c0_22, %c0_23] : memref<8x128xf32, #tpu.memory_space<vmem>>, vector<8x128xf32>
      tpu.vector_store %arg5[%c0_22, %c0_23], %77 {strides = array<i32>} : memref<8x128xf32, #tpu.memory_space<vmem>>, vector<8x128xf32>,
    } else {
    }
    %c0 = arith.constant 0 : index
    %c0_1 = arith.constant 0 : index
    %3 = vector.load %arg2[%c0, %c0_1] : memref<32x16xf32, #tpu.memory_space<vmem>>, vector<32x16xf32>
    %c0_2 = arith.constant 0 : index
    %c0_3 = arith.constant 0 : index
    %4 = vector.load %arg3[%c0_2, %c0_3] : memref<32x1xi32, #tpu.memory_space<vmem>>, vector<32x1xi32>
    %cst = arith.constant dense<0xFF800000> : vector<32xf32>
    %5 = vector.multi_reduction <maximumf>, %3, %cst [1] : vector<32x16xf32> to vector<32xf32>
    %6 = vector.shape_cast %5 : vector<32xf32> to vector<32x1xf32>
    %7 = vector.broadcast %6 : vector<32x1xf32> to vector<32x16xf32>
    %8 = arith.subf %3, %7 : vector<32x16xf32>
    %9 = math.exp %8 : vector<32x16xf32>
    %cst_4 = arith.constant dense<0.000000e+00> : vector<32xf32>
    %10 = vector.multi_reduction <add>, %9, %cst_4 [1] : vector<32x16xf32> to vector<32xf32>
    %11 = vector.shape_cast %10 : vector<32xf32> to vector<32x1xf32>
    %cst_5 = arith.constant 1.000000e+00 : f32
    %12 = vector.broadcast %cst_5 : f32 to vector<32x1xf32>
    %13 = arith.divf %12, %11 : vector<32x1xf32>
    %14 = tpu.iota {dimensions = array<i32: 1>} : vector<32x16xi32>
    %15 = vector.broadcast %4 : vector<32x1xi32> to vector<32x16xi32>
    %16 = arith.cmpi eq, %14, %15 : vector<32x16xi32>
    %cst_6 = arith.constant 0.000000e+00 : f32
    %17 = vector.broadcast %cst_6 : f32 to vector<32x16xf32>
    %18 = arith.select %16, %3, %17 : vector<32x16xi1>, vector<32x16xf32>
    %cst_7 = arith.constant dense<0.000000e+00> : vector<32xf32>
    %19 = vector.multi_reduction <add>, %18, %cst_7 [1] : vector<32x16xf32> to vector<32xf32>
    %20 = vector.shape_cast %19 : vector<32xf32> to vector<32x1xf32>
    %21 = arith.subf %20, %6 : vector<32x1xf32>
    %22 = math.exp %21 : vector<32x1xf32>
    %23 = arith.divf %22, %11 : vector<32x1xf32>
    %c1_i32 = arith.constant 1 : i32
    %24 = arith.muli %arg0, %c1_i32 : i32
    %25 = arith.addi %24, %arg1 : i32
    %c32_i32 = arith.constant 32 : i32
    %26 = arith.muli %25, %c32_i32 : i32
    %27 = tpu.iota {dimensions = array<i32: 0>} : vector<32x1xi32>
    %28 = vector.broadcast %26 : i32 to vector<32x1xi32>
    %29 = arith.addi %28, %27 : vector<32x1xi32>
    %c64_i32 = arith.constant 64 : i32
    %30 = vector.broadcast %c64_i32 : i32 to vector<32x1xi32>
    %31 = arith.cmpi slt, %29, %30 : vector<32x1xi32>
    %32 = arith.extui %31 : vector<32x1xi1> to vector<32x1xi32>
    %33 = arith.sitofp %32 : vector<32x1xi32> to vector<32x1xf32>
    %34 = tpu.iota {dimensions = array<i32: 1>} : vector<1x128xi32>
    %35 = arith.sitofp %34 : vector<1x128xi32> to vector<1x128xf32>
    %cst_8 = arith.constant 1.500000e+01 : f32
    %36 = vector.broadcast %cst_8 : f32 to vector<1x128xf32>
    %37 = arith.divf %35, %36 : vector<1x128xf32>
    %cst_9 = arith.constant 1.000000e+00 : f32
    %38 = vector.broadcast %cst_9 : f32 to vector<1x128xf32>
    %39 = arith.addf %35, %38 : vector<1x128xf32>
    %cst_10 = arith.constant 1.500000e+01 : f32
    %40 = vector.broadcast %cst_10 : f32 to vector<1x128xf32>
    %41 = arith.divf %39, %40 : vector<1x128xf32>
    %42 = vector.broadcast %13 : vector<32x1xf32> to vector<32x128xf32>
    %43 = vector.broadcast %37 : vector<1x128xf32> to vector<32x128xf32>
    %44 = arith.cmpf ogt, %42, %43 : vector<32x128xf32>
    %45 = vector.broadcast %13 : vector<32x1xf32> to vector<32x128xf32>
    %46 = vector.broadcast %41 : vector<1x128xf32> to vector<32x128xf32>
    %47 = arith.cmpf ole, %45, %46 : vector<32x128xf32>
    %48 = arith.andi %44, %47 : vector<32x128xi1>
    %49 = arith.extui %48 : vector<32x128xi1> to vector<32x128xi32>
    %50 = arith.sitofp %49 : vector<32x128xi32> to vector<32x128xf32>
    %51 = tpu.iota {dimensions = array<i32: 1>} : vector<32x8xi32>
    %c0_i32_11 = arith.constant 0 : i32
    %52 = vector.broadcast %c0_i32_11 : i32 to vector<32x8xi32>
    %53 = arith.cmpi eq, %51, %52 : vector<32x8xi32>
    %c1_i32_12 = arith.constant 1 : i32
    %54 = vector.broadcast %c1_i32_12 : i32 to vector<32x8xi32>
    %55 = arith.cmpi eq, %51, %54 : vector<32x8xi32>
    %56 = arith.mulf %33, %13 : vector<32x1xf32>
    %c2_i32 = arith.constant 2 : i32
    %57 = vector.broadcast %c2_i32 : i32 to vector<32x8xi32>
    %58 = arith.cmpi eq, %51, %57 : vector<32x8xi32>
    %59 = arith.mulf %33, %23 : vector<32x1xf32>
    %cst_13 = arith.constant 0.000000e+00 : f32
    %60 = vector.shape_cast %59 : vector<32x1xf32> to vector<32x1xf32>
    %61 = vector.broadcast %60 : vector<32x1xf32> to vector<32x8xf32>
    %62 = vector.broadcast %cst_13 : f32 to vector<32x8xf32>
    %63 = arith.select %58, %61, %62 : vector<32x8xi1>, vector<32x8xf32>
    %64 = vector.shape_cast %56 : vector<32x1xf32> to vector<32x1xf32>
    %65 = vector.broadcast %64 : vector<32x1xf32> to vector<32x8xf32>
    %66 = arith.select %55, %65, %63 : vector<32x8xi1>, vector<32x8xf32>
    %67 = vector.shape_cast %33 : vector<32x1xf32> to vector<32x1xf32>
    %68 = vector.broadcast %67 : vector<32x1xf32> to vector<32x8xf32>
    %69 = arith.select %53, %68, %66 : vector<32x8xi1>, vector<32x8xf32>
    %c0_14 = arith.constant 0 : index
    %c0_15 = arith.constant 0 : index
    %70 = vector.load %arg5[%c0_14, %c0_15] : memref<8x128xf32, #tpu.memory_space<vmem>>, vector<8x128xf32>
    %cst_16 = arith.constant dense<0.000000e+00> : vector<8x128xf32>
    %71 = tpu.matmul %69, %50, %cst_16 {dimension_numbers = #tpu.dot_dimension_numbers<[0], [0], [1], [1], [0, 1, 1, 1], [], []>} : vector<32x8xf32>, vector<32x128xf32>, vector<8x128xf32> -> vector<8x128xf32>
    %72 = arith.addf %70, %71 : vector<8x128xf32>
    %c0_17 = arith.constant 0 : index
    %c0_18 = arith.constant 0 : index
    %73 = vector.load %arg5[%c0_17, %c0_18] : memref<8x128xf32, #tpu.memory_space<vmem>>, vector<8x128xf32>
    tpu.vector_store %arg5[%c0_17, %c0_18], %72 {strides = array<i32>} : memref<8x128xf32, #tpu.memory_space<vmem>>, vector<8x128xf32>,
    %c0_i32_19 = arith.constant 0 : i32
    %74 = arith.cmpi eq, %arg1, %c0_i32_19 : i32
    %75 = arith.extui %74 : i1 to i32
    %c0_i32_20 = arith.constant 0 : i32
    %76 = arith.cmpi ne, %75, %c0_i32_20 : i32
    scf.if %76 {
      %c0_21 = arith.constant 0 : index
      %c0_22 = arith.constant 0 : index
      %77 = vector.load %arg5[%c0_21, %c0_22] : memref<8x128xf32, #tpu.memory_space<vmem>>, vector<8x128xf32>
      %c0_23 = arith.constant 0 : index
      %c0_24 = arith.constant 0 : index
      %c0_25 = arith.constant 0 : index
      %78 = vector.load %arg4[%c0_23, %c0_24, %c0_25] : memref<1x8x128xf32, #tpu.memory_space<vmem>>, vector<1x8x128xf32>
      %79 = vector.shape_cast %78 : vector<1x8x128xf32> to vector<8x128xf32>
      %80 = vector.shape_cast %77 : vector<8x128xf32> to vector<1x8x128xf32>
      tpu.vector_store %arg4[%c0_23, %c0_24, %c0_25], %80 {strides = array<i32>} : memref<1x8x128xf32, #tpu.memory_space<vmem>>, vector<1x8x128xf32>,
    } else {
    }
    return
  }
  func.func @transform_0(%arg0: i32, %arg1: i32) -> (i32, i32) {
    %c1_i32 = arith.constant 1 : i32
    %0 = arith.muli %arg0, %c1_i32 : i32
    %1 = arith.addi %0, %arg1 : i32
    %c0_i32 = arith.constant 0 : i32
    %c0_i32_0 = arith.constant 0 : i32
    return %1, %c0_i32 : i32, i32
  }
  func.func @transform_1(%arg0: i32, %arg1: i32) -> (i32, i32) {
    %c1_i32 = arith.constant 1 : i32
    %0 = arith.muli %arg0, %c1_i32 : i32
    %1 = arith.addi %0, %arg1 : i32
    %c0_i32 = arith.constant 0 : i32
    %c0_i32_0 = arith.constant 0 : i32
    return %1, %c0_i32 : i32, i32
  }
  func.func @transform_2(%arg0: i32, %arg1: i32) -> (i32, i32, i32) {
    %c0_i32 = arith.constant 0 : i32
    %c0_i32_0 = arith.constant 0 : i32
    %c0_i32_1 = arith.constant 0 : i32
    return %arg0, %c0_i32, %c0_i32_0 : i32, i32, i32
  }
}

</mosaic_0001>

<llo_original>
// kernel: tpu_custom_call.1
$region0: #{tpu_custom_call.1}
  #allocation0 [shape = 'u32[]', space=smem, size = 0x4, offset = 0x4, fixed_abs, tag = 'smem constant byte address 0x4 - core index']
  #allocation1 [shape = 'u32[144,128]{1,0:T(1,128)}', space=vmem, size = 0x12000, scoped, tag = 'internal scratch']
  #allocation2 [shape = 'f32[8,128]{1,0:T(8,128)}', space=vmem, size = 0x1000, scoped, tag = 'scratch operand']
  %s0 = inlined_call_operand.vmem [shape: f32[64,16], index: 0, kind: input, shape index: {}]
  %s1 = inlined_call_operand.vmem [shape: s32[64,1], index: 1, kind: input, shape index: {}]
  %s2 = inlined_call_operand.hbm [shape: f32[2,8,128], index: 2, kind: output, shape index: {}]
  %s3 = sld [smem:[#allocation0]]
  $region49: #{tpu_custom_call.1} parent=0
    _
  %s5 = ssub.s32 1, %s3
  %s6 = scalar_select 0, %s5, %s3
  $region1: #{tpu_custom_call.1} parent=0
    #allocation3 [shape = 'u8[8192]{0}', space=vmem, size = 0x2000, scoped, tag = 'output window, operand 0']
    #allocation4 [shape = 's32[2]{0}', space=sflag, size = 0x8, scoped, tag = 'scoped memory for tpu_custom_call.1']
    %7 = vsyncpa [#allocation4], 0
    %s8 = scalar_lea.sflag [#allocation4], 1
    %9 = vsyncpa %s8, 0
    loop: start=0, step=1, limit=4
    $region2: #{tpu_custom_call.1} parent=1 // loop_pre_header
      _
    $region3: #{tpu_custom_call.1} parent=1 // loop_header
      %s11 = sphi 0, %s15
      %p12 = scmp.ge.s32.totalorder %s11, 4
      %s18 = sphi 0, %s30
      %s19 = sphi 0, %s26
      %s20 = sphi 0, %s18
      %s21 = sphi 0, %s19
      %s22 = sphi 0, %s20
      %s23 = sphi 0, %s21
      %s35 = sphi 0, %s37
      %s38 = sphi 0, %s35
      %s39 = sphi 0, %s38
      %s55 = sphi 0, %s39
      %s63 = sphi 0, %s65
      %s66 = sphi 0, %s63
      %s67 = sphi 0, %s66
      %s83 = sphi 0, %s67
      %s89 = sphi 0, %s91
      %s92 = sphi 0, %s89
      %s93 = sphi 0, %s92
      %s109 = sphi 0, %s93
    $region4: #{tpu_custom_call.1} parent=1 // loop_header_branch
      %14 = sbr.rel (%p12) target = $region8
    $region5: #{tpu_custom_call.1} parent=1 // loop_body
      %s16 = ssub.s32 %s11, 1
      %s17 = ssub.s32 %s11, 2
      %s24 = sadd.s32 1, %s19
      %p25 = scmp.ge.s32.totalorder %s24, 1
      %s26 = scalar_select %p25, 0, %s24
      %s27 = sadd.s32 1, %s18
      %s28 = scalar_select %p25, %s27, %s18
      %p29 = scmp.ge.s32.totalorder %s28, 2
      %s30 = scalar_select %p29, 0, %s28
      %s31 = sadd.s32 %s18, %s19
      %s32 = sadd.s32 %s30, %s26
      %s33 = ssub.s32 %s31, %s32
      %p34 = scmp.eq.s32.totalorder %s33, 0
      %s36 = sadd.s32 %s35, 1
      %s37 = scalar_select %p34, %s35, %s36
      %p40 = pneg %p34
      %p41 = scmp.eq.s32.totalorder %s11, 1
      %p42 = por %p40, %p41
      %p43 = scmp.ne.s32.totalorder %s35, %s38
      %p44 = scmp.eq.s32.totalorder %s11, 0
      %p45 = por %p43, %p44
      %p46 = scmp.ne.s32.totalorder %s35, %s38
      %p47 = scmp.eq.s32.totalorder %s16, 1
      %p48 = por %p46, %p47
      %p49 = scmp.ne.s32.totalorder %s38, %s39
      %p50 = scmp.eq.s32.totalorder %s16, 0
      %p51 = por %p49, %p50
      %p52 = scmp.ne.s32.totalorder %s38, %s39
      %p53 = scmp.eq.s32.totalorder %s17, 1
      %p54 = por %p52, %p53
      %p56 = scmp.ne.s32.totalorder %s39, %s55
      %p57 = scmp.eq.s32.totalorder %s17, 0
      %p58 = por %p56, %p57
      %s59 = sadd.s32 %s18, %s19
      %s60 = sadd.s32 %s30, %s26
      %s61 = ssub.s32 %s59, %s60
      %p62 = scmp.eq.s32.totalorder %s61, 0
      %s64 = sadd.s32 %s63, 1
      %s65 = scalar_select %p62, %s63, %s64
      %p68 = pneg %p62
      %p69 = scmp.eq.s32.totalorder %s11, 1
      %p70 = por %p68, %p69
      %p71 = scmp.ne.s32.totalorder %s63, %s66
      %p72 = scmp.eq.s32.totalorder %s11, 0
      %p73 = por %p71, %p72
      %p74 = scmp.ne.s32.totalorder %s63, %s66
      %p75 = scmp.eq.s32.totalorder %s16, 1
      %p76 = por %p74, %p75
      %p77 = scmp.ne.s32.totalorder %s66, %s67
      %p78 = scmp.eq.s32.totalorder %s16, 0
      %p79 = por %p77, %p78
      %p80 = scmp.ne.s32.totalorder %s66, %s67
      %p81 = scmp.eq.s32.totalorder %s17, 1
      %p82 = por %p80, %p81
      %p84 = scmp.ne.s32.totalorder %s67, %s83
      %p85 = scmp.eq.s32.totalorder %s17, 0
      %p86 = por %p84, %p85
      %s87 = ssub.s32 %s18, %s30
      %p88 = scmp.eq.s32.totalorder %s87, 0
      %s90 = sadd.s32 %s89, 1
      %s91 = scalar_select %p88, %s89, %s90
      %p94 = pneg %p88
      %p95 = scmp.eq.s32.totalorder %s11, 1
      %p96 = por %p94, %p95
      %p97 = scmp.ne.s32.totalorder %s89, %s92
      %p98 = scmp.eq.s32.totalorder %s11, 0
      %p99 = por %p97, %p98
      %p100 = scmp.ne.s32.totalorder %s89, %s92
      %p101 = scmp.eq.s32.totalorder %s16, 1
      %p102 = por %p100, %p101
      %p103 = scmp.ne.s32.totalorder %s92, %s93
      %p104 = scmp.eq.s32.totalorder %s16, 0
      %p105 = por %p103, %p104
      %p106 = scmp.ne.s32.totalorder %s92, %s93
      %p107 = scmp.eq.s32.totalorder %s17, 1
      %p108 = por %p106, %p107
      %p110 = scmp.ne.s32.totalorder %s93, %s109
      %p111 = scmp.eq.s32.totalorder %s17, 0
      %p112 = por %p110, %p111
      %p113 = scmp.le.s32.totalorder 1, %s11
      %p114 = scmp.lt.s32.totalorder %s11, 3
      %p115 = pnand %p113, %p114
      %p116 = pneg %p115
      // Predicated region
      $region9: #{tpu_custom_call.1} parent=5 // pred_check
        _
      $region10: #{tpu_custom_call.1} parent=5 // pred_check_branch
        %118 = sbr.rel (%p115) target = $region12
      $region11: #{tpu_custom_call.1} parent=5 // pred_region
        %s119 = ssub.s32 %s11, 1
      $region12: #{tpu_custom_call.1} parent=5 // pred_fallthru
        _
      %p120 = scmp.lt.s32.totalorder %s11, 2
      // Predicated region
      $region13: #{tpu_custom_call.1} parent=5 // pred_check
        %p121 = pneg %p120
      $region14: #{tpu_custom_call.1} parent=5 // pred_check_branch
        %123 = sbr.rel (%p121) target = $region16
      $region15: #{tpu_custom_call.1} parent=5 // pred_region
        // Predicated region
        $region17: #{tpu_custom_call.1} parent=15 // pred_check
          %p124 = pneg %p45
        $region18: #{tpu_custom_call.1} parent=15 // pred_check_branch
          %126 = sbr.rel (%p124) target = $region20
        $region19: #{tpu_custom_call.1} parent=15 // pred_region
          %s127 = sadd.s32 %s18, %s19
          %s128 = smul.u32 4, %s127
          %p129 = scmp.lt.s32.totalorder %s128, 7
          %s130 = scalar_select %p129, %s128, 7
          %s131 = smul.addr %s130, 8
          %s132 = scalar_lea.vmem %s0, %s131
          %s133 = sadd.s32 %s18, %s19
          %s134 = smul.u32 4, %s133
        $region20: #{tpu_custom_call.1} parent=15 // pred_fallthru
          _
        // Predicated region
        $region21: #{tpu_custom_call.1} parent=15 // pred_check
          %p135 = pneg %p73
        $region22: #{tpu_custom_call.1} parent=15 // pred_check_branch
          %137 = sbr.rel (%p135) target = $region24
        $region23: #{tpu_custom_call.1} parent=15 // pred_region
          %s138 = sadd.s32 %s18, %s19
          %s139 = smul.u32 4, %s138
          %p140 = scmp.lt.s32.totalorder %s139, 7
          %s141 = scalar_select %p140, %s139, 7
          %s142 = smul.addr %s141, 8
          %s143 = scalar_lea.vmem %s1, %s142
          %s144 = sadd.s32 %s18, %s19
          %s145 = smul.u32 4, %s144
        $region24: #{tpu_custom_call.1} parent=15 // pred_fallthru
          _
      $region16: #{tpu_custom_call.1} parent=5 // pred_fallthru
        _
      %p146 = scmp.le.s32.totalorder 1, %s11
      %p147 = scmp.lt.s32.totalorder %s11, 3
      %p148 = pnand %p146, %p147
      %p149 = pneg %p148
      // Predicated region
      $region25: #{tpu_custom_call.1} parent=5 // pred_check
        _
      $region26: #{tpu_custom_call.1} parent=5 // pred_check_branch
        %151 = sbr.rel (%p148) target = $region28
      $region27: #{tpu_custom_call.1} parent=5 // pred_region
        %s152 = ssub.s32 %s11, 1
        %s153 = sadd.s32 %s20, %s21
        %s154 = smul.u32 4, %s153
        %p155 = scmp.lt.s32.totalorder %s154, 7
        %s156 = scalar_select %p155, %s154, 7
        %s157 = smul.addr %s156, 8
        %s158 = scalar_lea.vmem %s0, %s157
        %p159 = pneg %p51
        %p160 = pneg %p48
        %s161 = sadd.s32 %s20, %s21
        %s162 = smul.u32 4, %s161
        %p163 = scmp.lt.s32.totalorder %s162, 7
        %s164 = scalar_select %p163, %s162, 7
        %s165 = smul.addr %s164, 8
        %s166 = scalar_lea.vmem %s1, %s165
        %p167 = pneg %p79
        %p168 = pneg %p76
        %p169 = pneg %p105
        %p170 = pneg %p102
        %s171 = sand.u32 %s92, 1
        %s172 = scalar_lea.sflag [#allocation4], %s171
        %s173 = sand.u32 %s92, 1
        %s174 = smul.addr %s173, 8
        %s175 = scalar_lea.vmem [#allocation3], %s174
        %s176 = sadd.s32 %s20, %s21
        %s177 = smul.u32 4, %s176
        %p178 = scmp.lt.s32.totalorder %s177, 7
        %s179 = scalar_select %p178, %s177, 7
        %s180 = smul.addr %s179, 8
        %s181 = scalar_lea.vmem %s0, %s180
        %s182 = sadd.s32 %s20, %s21
        %s183 = smul.u32 4, %s182
        %s184 = sadd.s32 %s20, %s21
        %s185 = smul.u32 4, %s184
        %p186 = scmp.lt.s32.totalorder %s185, 7
        %s187 = scalar_select %p186, %s185, 7
        %s188 = smul.addr %s187, 8
        %s189 = scalar_lea.vmem %s1, %s188
        %s190 = sadd.s32 %s20, %s21
        %s191 = smul.u32 4, %s190
        %p192 = scmp.eq.s32.totalorder %s21, 0
        // Predicated region
        $region29: #{tpu_custom_call.1} parent=27 // pred_check
          %p193 = pneg %p192
        $region30: #{tpu_custom_call.1} parent=27 // pred_check_branch
          %195 = sbr.rel (%p193) target = $region32
        $region31: #{tpu_custom_call.1} parent=27 // pred_region
          %196 = vst [vmem:[#allocation2] sm:$0xff] 0.0
        $region32: #{tpu_custom_call.1} parent=27 // pred_fallthru
          _
        %v197 = vld [vmem:[%s181] sm:$0xff]
        %v198 = vld [vmem:[%s181 + $0x8] sm:$0xff]
        %v199 = vld [vmem:[%s181 + $0x10] sm:$0xff]
        %v200 = vld [vmem:[%s181 + $0x18] sm:$0xff]
        %v201 = vld [vmem:[%s189] sm:$0xff]
        %v202 = vld [vmem:[%s189 + $0x8] sm:$0xff]
        %v203 = vld [vmem:[%s189 + $0x10] sm:$0xff]
        %v204 = vld [vmem:[%s189 + $0x18] sm:$0xff]
        %vm205 = vcmask 130048
        %v206 = vsel %vm205, %v197, -inf
        %207 = vmax.xlane.f32.xlu0 %v206
        %v208 = vpop.xlane.xlu0 %207
        %v209 = vsel %vm205, %v198, -inf
        %210 = vmax.xlane.f32.xlu0 %v209
        %v211 = vpop.xlane.xlu0 %210
        %v212 = vsel %vm205, %v199, -inf
        %213 = vmax.xlane.f32.xlu0 %v212
        %v214 = vpop.xlane.xlu0 %213
        %v215 = vsel %vm205, %v200, -inf
        %216 = vmax.xlane.f32.xlu0 %v215
        %v217 = vpop.xlane.xlu0 %216
        %v218 = vsub.f32 %v197, %v208
        %v219 = vsub.f32 %v198, %v211
        %v220 = vsub.f32 %v199, %v214
        %v221 = vsub.f32 %v200, %v217
        %v222 = vmul.f32 %v218, 1.442695
        %v223 = vpow.pop %v222
        %v224 = vmul.f32 %v219, 1.442695
        %v225 = vpow.pop %v224
        %v226 = vmul.f32 %v220, 1.442695
        %v227 = vpow.pop %v226
        %v228 = vmul.f32 %v221, 1.442695
        %v229 = vpow.pop %v228
        %v230 = vsel %vm205, %v223, 0.0
        %231 = vadd.xlane.f32.xlu0 %v230
        %v232 = vpop.xlane.xlu0 %231
        %v233 = vsel %vm205, %v225, 0.0
        %234 = vadd.xlane.f32.xlu0 %v233
        %v235 = vpop.xlane.xlu0 %234
        %v236 = vsel %vm205, %v227, 0.0
        %237 = vadd.xlane.f32.xlu0 %v236
        %v238 = vpop.xlane.xlu0 %237
        %v239 = vsel %vm205, %v229, 0.0
        %240 = vadd.xlane.f32.xlu0 %v239
        %v241 = vpop.xlane.xlu0 %240
        %v242 = vrcp.pop %v232
        %v243 = vmul.f32 1.0, %v242
        %v244 = vrcp.pop %v235
        %v245 = vmul.f32 1.0, %v244
        %v246 = vrcp.pop %v238
        %v247 = vmul.f32 1.0, %v246
        %v248 = vrcp.pop %v241
        %v249 = vmul.f32 1.0, %v248
        %v250 = vlaneseq
        %v251 = vand.u32 %v250, 127
        %252 = vset.pattern.permute.xlu0 0
        %253 = vperm.xlu0 %252, %v201
        %v254 = vpop.permute.xlu0 %253
        %255 = vset.pattern.permute.xlu0 0
        %256 = vperm.xlu0 %255, %v202
        %v257 = vpop.permute.xlu0 %256
        %258 = vset.pattern.permute.xlu0 0
        %259 = vperm.xlu0 %258, %v203
        %v260 = vpop.permute.xlu0 %259
        %261 = vset.pattern.permute.xlu0 0
        %262 = vperm.xlu0 %261, %v204
        %v263 = vpop.permute.xlu0 %262
        %vm264 = vcmp.eq.s32.totalorder %v251, %v254
        %vm265 = vcmp.eq.s32.totalorder %v251, %v257
        %vm266 = vcmp.eq.s32.totalorder %v251, %v260
        %vm267 = vcmp.eq.s32.totalorder %v251, %v263
        %v268 = vsel %vm264, %v197, 0.0
        %v269 = vsel %vm265, %v198, 0.0
        %v270 = vsel %vm266, %v199, 0.0
        %v271 = vsel %vm267, %v200, 0.0
        %v272 = vsel %vm205, %v268, 0.0
        %273 = vadd.xlane.f32.xlu0 %v272
        %v274 = vpop.xlane.xlu0 %273
        %v275 = vsel %vm205, %v269, 0.0
        %276 = vadd.xlane.f32.xlu0 %v275
        %v277 = vpop.xlane.xlu0 %276
        %v278 = vsel %vm205, %v270, 0.0
        %279 = vadd.xlane.f32.xlu0 %v278
        %v280 = vpop.xlane.xlu0 %279
        %v281 = vsel %vm205, %v271, 0.0
        %282 = vadd.xlane.f32.xlu0 %v281
        %v283 = vpop.xlane.xlu0 %282
        %v284 = vsub.f32 %v274, %v208
        %v285 = vsub.f32 %v277, %v211
        %v286 = vsub.f32 %v280, %v214
        %v287 = vsub.f32 %v283, %v217
        %v288 = vmul.f32 %v284, 1.442695
        %v289 = vpow.pop %v288
        %v290 = vmul.f32 %v285, 1.442695
        %v291 = vpow.pop %v290
        %v292 = vmul.f32 %v286, 1.442695
        %v293 = vpow.pop %v292
        %v294 = vmul.f32 %v287, 1.442695
        %v295 = vpow.pop %v294
        %v296 = vmul.f32 %v289, %v242
        %v297 = vmul.f32 %v291, %v244
        %v298 = vmul.f32 %v293, %v246
        %v299 = vmul.f32 %v295, %v248
        %s300 = sadd.s32 %s20, %s21
        %s301 = smul.u32 %s300, 32
        %v302 = vlaneseq
        %v303 = vshrl.u32 %v302, 7
        %v304 = vadd.s32 %v303, 8
        %v305 = vadd.s32 %v303, 16
        %v306 = vadd.s32 %v303, 24
        %v307 = vstv %s301
        %v308 = vadd.s32 %v307, %v303
        %v309 = vadd.s32 %v307, %v304
        %v310 = vadd.s32 %v307, %v305
        %v311 = vadd.s32 %v307, %v306
        %vm312 = vcmp.lt.s32.totalorder %v308, 64
        %vm313 = vcmp.lt.s32.totalorder %v309, 64
        %vm314 = vcmp.lt.s32.totalorder %v310, 64
        %vm315 = vcmp.lt.s32.totalorder %v311, 64
        %v316 = vsel %vm312, 1, 0
        %v317 = vsel %vm313, 1, 0
        %v318 = vsel %vm314, 1, 0
        %v319 = vsel %vm315, 1, 0
        %v320 = vcvt.s32.f32 %v316
        %v321 = vcvt.s32.f32 %v317
        %v322 = vcvt.s32.f32 %v318
        %v323 = vcvt.s32.f32 %v319
        %v324 = vcvt.s32.f32 %v251
        %v325 = vrcp.pop 15.0
        %v326 = vmul.f32 %v324, %v325
        %v327 = vadd.f32 %v324, 1.0
        %v328 = vmul.f32 %v327, %v325
        %vm329 = vcmp.gt.f32.partialorder %v243, %v326
        %vm330 = vcmp.gt.f32.partialorder %v245, %v326
        %vm331 = vcmp.gt.f32.partialorder %v247, %v326
        %vm332 = vcmp.gt.f32.partialorder %v249, %v326
        %vm333 = vcmp.le.f32.partialorder %v243, %v328
        %vm334 = vcmp.le.f32.partialorder %v245, %v328
        %vm335 = vcmp.le.f32.partialorder %v247, %v328
        %vm336 = vcmp.le.f32.partialorder %v249, %v328
        %vm337 = vmand %vm329, %vm333
        %vm338 = vmand %vm330, %vm334
        %vm339 = vmand %vm331, %vm335
        %vm340 = vmand %vm332, %vm336
        %v341 = vsel %vm337, 1, 0
        %v342 = vsel %vm338, 1, 0
        %v343 = vsel %vm339, 1, 0
        %v344 = vsel %vm340, 1, 0
        %v345 = vcvt.s32.f32 %v341
        %v346 = vcvt.s32.f32 %v342
        %v347 = vcvt.s32.f32 %v343
        %v348 = vcvt.s32.f32 %v344
        %vm349 = vcmp.eq.s32.totalorder %v251, 0
        %vm350 = vcmp.eq.s32.totalorder %v251, 1
        %v351 = vmul.f32 %v320, %v243
        %v352 = vmul.f32 %v321, %v245
        %v353 = vmul.f32 %v322, %v247
        %v354 = vmul.f32 %v323, %v249
        %vm355 = vcmp.eq.s32.totalorder %v251, 2
        %v356 = vmul.f32 %v320, %v296
        %v357 = vmul.f32 %v321, %v297
        %v358 = vmul.f32 %v322, %v298
        %v359 = vmul.f32 %v323, %v299
        %v360 = vsel %vm355, %v356, 0.0
        %v361 = vsel %vm355, %v357, 0.0
        %v362 = vsel %vm355, %v358, 0.0
        %v363 = vsel %vm355, %v359, 0.0
        %v364 = vsel %vm350, %v351, %v360
        %v365 = vsel %vm350, %v352, %v361
        %v366 = vsel %vm350, %v353, %v362
        %v367 = vsel %vm350, %v354, %v363
        %v368 = vsel %vm349, %v320, %v364
        %v369 = vsel %vm349, %v321, %v365
        %v370 = vsel %vm349, %v322, %v366
        %v371 = vsel %vm349, %v323, %v367
        %v372 = vld [vmem:[#allocation2] sm:$0xff]
        %373 = vxpose.xlu0.b32.start [1/16] %v368, 128
        %374 = vxpose.xlu0.b32.cont [2/16] %v369, 128
        %375 = vxpose.xlu0.b32.cont [3/16] %v370, 128
        %376 = vxpose.xlu0.b32.cont [4/16] %v371, 128
        %377 = vxpose.xlu0.b32.cont [5/16] 0.0, 128
        %378 = vxpose.xlu0.b32.cont [6/16] 0.0, 128
        %379 = vxpose.xlu0.b32.cont [7/16] 0.0, 128
        %380 = vxpose.xlu0.b32.cont [8/16] 0.0, 128
        %381 = vxpose.xlu0.b32.cont [9/16] 0.0, 128
        %382 = vxpose.xlu0.b32.cont [10/16] 0.0, 128
        %383 = vxpose.xlu0.b32.cont [11/16] 0.0, 128
        %384 = vxpose.xlu0.b32.cont [12/16] 0.0, 128
        %385 = vxpose.xlu0.b32.cont [13/16] 0.0, 128
        %386 = vxpose.xlu0.b32.cont [14/16] 0.0, 128
        %387 = vxpose.xlu0.b32.cont [15/16] 0.0, 128
        %388 = vxpose.xlu0.b32.end [16/16] 0.0, 128
        %v389 = vpop.trf.xlu0
        %v390 = vpop.trf.xlu0
        %v391 = vpop.trf.xlu0
        %v392 = vpop.trf.xlu0
        %v393 = vpop.trf.xlu0
        %v394 = vpop.trf.xlu0
        %v395 = vpop.trf.xlu0
        %v396 = vpop.trf.xlu0
        %v397 = vpop.trf.xlu0
        %v398 = vpop.trf.xlu0
        %v399 = vpop.trf.xlu0
        %v400 = vpop.trf.xlu0
        %v401 = vpop.trf.xlu0
        %v402 = vpop.trf.xlu0
        %v403 = vpop.trf.xlu0
        %v404 = vpop.trf.xlu0
        %vm405 = vcmask 261120
        %v407 = vsel %vm405, %v389, 0
        %409 = vmatprep.subr.mxu0 0.0
        %410 = vmatpush1.msra.mxu0 %v345
        %411 = vmatprep.subr.mxu0 0.0
        %412 = vmatpush1.msra.mxu0 %v346
        %413 = vmatprep.subr.mxu0 0.0
        %414 = vmatpush1.msra.mxu0 %v347
        %415 = vmatprep.subr.mxu0 0.0
        %416 = vmatpush1.msra.mxu0 %v348
        %417 = vmatprep.subr.mxu0 0.0
        %418 = vmatpush1.msra.mxu0 0.0
        %419 = vmatprep.subr.mxu0 0.0
        %420 = vmatpush1.msra.mxu0 0.0
        %421 = vmatprep.subr.mxu0 0.0
        %422 = vmatpush1.msra.mxu0 0.0
        %423 = vmatprep.subr.mxu0 0.0
        %424 = vmatpush1.msra.mxu0 0.0
        %425 = vmatprep.subr.mxu0 0.0
        %426 = vmatpush1.msra.mxu0 0.0
        %427 = vmatprep.subr.mxu0 0.0
        %428 = vmatpush1.msra.mxu0 0.0
        %429 = vmatprep.subr.mxu0 0.0
        %430 = vmatpush1.msra.mxu0 0.0
        %431 = vmatprep.subr.mxu0 0.0
        %432 = vmatpush1.msra.mxu0 0.0
        %433 = vmatprep.subr.mxu0 0.0
        %434 = vmatpush1.msra.mxu0 0.0
        %435 = vmatprep.subr.mxu0 0.0
        %436 = vmatpush1.msra.mxu0 0.0
        %437 = vmatprep.subr.mxu0 0.0
        %438 = vmatpush1.msra.mxu0 0.0
        %439 = vmatprep.subr.mxu0 0.0
        %440 = vmatpush1.msra.mxu0 0.0
        %441 = vmatprep.subr.mxu0 0.0
        %442 = vmatpush1.msra.mxu0 0.0
        %443 = vmatprep.subr.mxu0 0.0
        %444 = vmatpush1.msra.mxu0 0.0
        %445 = vmatprep.subr.mxu0 0.0
        %446 = vmatpush1.msra.mxu0 0.0
        %447 = vmatprep.subr.mxu0 0.0
        %448 = vmatpush1.msra.mxu0 0.0
        %449 = vmatprep.subr.mxu0 0.0
        %450 = vmatpush1.msra.mxu0 0.0
        %451 = vmatprep.subr.mxu0 0.0
        %452 = vmatpush1.msra.mxu0 0.0
        %453 = vmatprep.subr.mxu0 0.0
        %454 = vmatpush1.msra.mxu0 0.0
        %455 = vmatprep.subr.mxu0 0.0
        %456 = vmatpush1.msra.mxu0 0.0
        %457 = vmatprep.subr.mxu0 0.0
        %458 = vmatpush1.msra.mxu0 0.0
        %459 = vmatprep.subr.mxu0 0.0
        %460 = vmatpush1.msra.mxu0 0.0
        %461 = vmatprep.subr.mxu0 0.0
        %462 = vmatpush1.msra.mxu0 0.0
        %463 = vmatprep.subr.mxu0 0.0
        %464 = vmatpush1.msra.mxu0 0.0
        %465 = vmatprep.subr.mxu0 0.0
        %466 = vmatpush1.msra.mxu0 0.0
        %467 = vmatprep.subr.mxu0 0.0
        %468 = vmatpush1.msra.mxu0 0.0
        %469 = vmatprep.subr.mxu0 0.0
        %470 = vmatpush1.msra.mxu0 0.0
        %471 = vmatprep.subr.mxu0 0.0
        %472 = vmatpush1.msra.mxu0 0.0
        %473 = vmatprep.mubr.f32.mxu0 0.0
        %474 = vmatmul.mubr.f32.gmra.mrb[0].mxu0 %v407
        %v475 = vpop.f32.mrb[0].mxu0
        %v476 = vadd.f32 0.0, %v475
        %v477 = vpop.f32.mrb[0].mxu0
        %478 = vdwg.mxu0
        %v479 = vadd.f32 %v372, %v476
        %480 = vst [vmem:[#allocation2] sm:$0xff] %v479
        // Predicated region
        $region33: #{tpu_custom_call.1} parent=27 // pred_check
          %p481 = pneg %p192
        $region34: #{tpu_custom_call.1} parent=27 // pred_check_branch
          %483 = sbr.rel (%p481) target = $region36
        $region35: #{tpu_custom_call.1} parent=27 // pred_region
          %v484 = vld [vmem:[#allocation2] sm:$0xff]
          %485 = vst [vmem:[%s175] sm:$0xff] %v484
        $region36: #{tpu_custom_call.1} parent=27 // pred_fallthru
          _
        %s486 = sand.u32 %s92, 1
        %s487 = scalar_lea.sflag [#allocation4], %s486
        %s488 = sand.u32 %s92, 1
        %s489 = smul.addr %s488, 8
        %s490 = scalar_lea.vmem [#allocation3], %s489
        // Predicated region
        $region37: #{tpu_custom_call.1} parent=27 // pred_check
          %p491 = pneg %p102
        $region38: #{tpu_custom_call.1} parent=27 // pred_check_branch
          %493 = sbr.rel (%p491) target = $region40
        $region39: #{tpu_custom_call.1} parent=27 // pred_region
          %s495 = ssub.s32 128, 128
          %496 = vsyncadd %s487, %s495
          %s497 = smul.addr %s20, 128
          %s498 = scalar_lea.hbm %s2, %s497
          %s500 = sshll.u32 %s490, 4
          %s501 = int_to_ptr.vmem [resolvable:$true] %s500
          %503 = dma.vmem_to_hbm [thread:$0]  %s501, 128, %s498, %s487
        $region40: #{tpu_custom_call.1} parent=27 // pred_fallthru
          _
      $region28: #{tpu_custom_call.1} parent=5 // pred_fallthru
        _
      %p504 = scmp.le.s32.totalorder 2, %s11
      // Predicated region
      $region41: #{tpu_custom_call.1} parent=5 // pred_check
        %p505 = pneg %p504
      $region42: #{tpu_custom_call.1} parent=5 // pred_check_branch
        %507 = sbr.rel (%p505) target = $region44
      $region43: #{tpu_custom_call.1} parent=5 // pred_region
        %s508 = ssub.s32 %s11, 2
        // Predicated region
        $region45: #{tpu_custom_call.1} parent=43 // pred_check
          %p509 = pneg %p108
        $region46: #{tpu_custom_call.1} parent=43 // pred_check_branch
          %511 = sbr.rel (%p509) target = $region48
        $region47: #{tpu_custom_call.1} parent=43 // pred_region
          %s512 = sand.u32 %s93, 1
          %s513 = scalar_lea.sflag [#allocation4], %s512
          %s514 = sand.u32 %s93, 1
          %s515 = smul.addr %s514, 8
          %s516 = scalar_lea.vmem [#allocation3], %s515
          %517 = dma.done %s513, 128
        $region48: #{tpu_custom_call.1} parent=43 // pred_fallthru
          _
      $region44: #{tpu_custom_call.1} parent=5 // pred_fallthru
        _
    $region6: #{tpu_custom_call.1} parent=1 // loop_footer
      %s15 = sadd.s32 1, %s11
    $region7: #{tpu_custom_call.1} parent=1 // loop_footer_branch
      %10 = sbr.rel target = $region3
    $region8: #{tpu_custom_call.1} parent=1 // loop_exit
      _
    %518 = vsyncpa [#allocation4], 1
    %s519 = scalar_lea.sflag [#allocation4], 1
    %520 = vsyncpa %s519, 1

</llo_original>
